<compile_context>
chip_gen: v7x
topology: tpu7x:2x2x1
jax: 0.10.0
libtpu: 0.0.40
codegen_flags: <defaults>
</compile_context>

<pallas_src>
import jax
import jax.numpy as jnp
from jax.experimental import pallas as pl
from jax.experimental.pallas import tpu as pltpu


def _global_mean_kernel(x_ref, w_ref, o_ref, acc_ref):
    """Grid: (batch tiles, spatial tiles); spatial axis is the reduction axis.

    x_ref:   (TB, TL)    input tile (any float dtype)
    w_ref:   (1, TL)     normalized area-weight tile (float32)
    o_ref:   (1, TB, 1)  output block for this batch tile
    acc_ref: (TB, 1)     float32 accumulator, persists across the spatial axis
    """
    l = pl.program_id(1)

    @pl.when(l == 0)
    def _init():
        acc_ref[...] = jnp.zeros_like(acc_ref)

    # Accumulate in float32 even for bf16 inputs; (1, TL) weights broadcast
    # over the TB rows for free (replicated sublane layout).
    x = x_ref[...].astype(jnp.float32)
    weighted = x * w_ref[...]
    acc_ref[...] += jnp.sum(weighted, axis=1, keepdims=True)

    @pl.when(l == pl.num_programs(1) - 1)
    def _store():
        o_ref[...] = acc_ref[...].astype(o_ref.dtype).reshape(o_ref.shape)


def global_mean(x, area, *, target_block_bytes=2 * 1024 * 1024):
    """Pallas equivalent of GlobalMean.forward.

    Args:
        x:    (n_samples, n_timesteps, n_channels, n_lat, n_lon)
        area: (n_lat, n_lon) raw (unnormalized) cell areas.
    Returns:
        (n_samples, n_timesteps, n_channels) area-weighted mean over (lat, lon).
    """
    ns, nt, nc, nlat, nlon = x.shape
    B = ns * nt * nc
    L = nlat * nlon

    # Parameter setup (matches torch __init__): normalized weights kept in f32.
    area32 = area.astype(jnp.float32)
    w = (area32 / jnp.sum(area32)).reshape(1, L)

    xf = x.reshape(B, L)
    out_dtype = jnp.promote_types(x.dtype, jnp.float32)
    itemsize = jnp.dtype(x.dtype).itemsize
    lane = 128

    # --- spatial (lane) axis: lane-dense tiles of <= max_tl columns ----------
    l128 = pl.cdiv(L, lane) * lane
    max_tl = max(lane, (target_block_bytes // (lane * itemsize)) // lane * lane)
    n_ltiles = pl.cdiv(l128, max_tl)
    TL = pl.cdiv(l128, lane * n_ltiles) * lane          # multiple of 128, <= max_tl
    Ls = TL * n_ltiles

    # --- batch (sublane) axis: rows per block sized to ~target_block_bytes ---
    max_tb = max(lane, (target_block_bytes // (TL * itemsize)) // lane * lane)
    n_btiles = pl.cdiv(B, max_tb)
    TB = pl.cdiv(B, lane * n_btiles) * lane              # multiple of 128, <= max_tb
    Bs = TB * n_btiles

    # Zero-pad: padded weight columns are zero (padded cells contribute 0);
    # padded batch rows are sliced off after the call.
    if (Bs, Ls) != (B, L):
        xf = jnp.pad(xf, ((0, Bs - B), (0, Ls - L)))
    if Ls != L:
        w = jnp.pad(w, ((0, 0), (0, Ls - L)))

    out = pl.pallas_call(
        _global_mean_kernel,
        out_shape=jax.ShapeDtypeStruct((n_btiles, TB, 1), out_dtype),
        grid_spec=pltpu.PrefetchScalarGridSpec(
            num_scalar_prefetch=0,
            grid=(n_btiles, n_ltiles),
            in_specs=[
                pl.BlockSpec((TB, TL), lambda i, l: (i, l)),
                pl.BlockSpec((1, TL), lambda i, l: (0, l)),
            ],
            out_specs=pl.BlockSpec((1, TB, 1), lambda i, l: (i, 0, 0)),
            scratch_shapes=[pltpu.VMEM((TB, 1), jnp.float32)],
        ),
        compiler_params=pltpu.CompilerParams(
            dimension_semantics=("parallel", "arbitrary"),
            vmem_limit_bytes=32 * 1024 * 1024,
        ),
    )(xf, w)

    return out.reshape(Bs)[:B].reshape(ns, nt, nc)


if __name__ == "__main__":
    key = jax.random.PRNGKey(0)
    k_area, k_x = jax.random.split(key)

    n_samples, n_timesteps, n_channels = 2, 3, 4
    n_lat, n_lon = 16, 16

    # deterministic synthetic "parameters" / inputs
    area = jax.random.uniform(k_area, (n_lat, n_lon), dtype=jnp.float32) + 0.1
    x = jax.random.normal(
        k_x, (n_samples, n_timesteps, n_channels, n_lat, n_lon), dtype=jnp.float32
    )

    y = global_mean(x, area)
    y = jax.block_until_ready(y)

    # reference check (pure JAX, mirrors the torch forward exactly)
    w_ref = area / jnp.sum(area)
    y_ref = jnp.sum(x * w_ref[None, None, None, :, :], axis=(3, 4))
    assert y.shape == (n_samples, n_timesteps, n_channels)
    assert jnp.allclose(y, y_ref, atol=1e-5, rtol=1e-5)

    print("KERNEL_OK")
</pallas_src>

<mosaic_0001>
module attributes {stable_mosaic.version = 11 : i64} {
  func.func @_global_mean_kernel(%arg0: i32, %arg1: i32, %arg2: memref<128x256xf32, #tpu.memory_space<vmem>>, %arg3: memref<1x256xf32, #tpu.memory_space<vmem>>, %arg4: memref<1x128x1xf32, #tpu.memory_space<vmem>>, %arg5: memref<128x1xf32, #tpu.memory_space<vmem>>) attributes {dimension_semantics = [#tpu.dimension_semantics<parallel>, #tpu.dimension_semantics<arbitrary>], iteration_bounds = array<i64: 1, 1>, scalar_prefetch = 0 : i64, scratch_operands = 1 : i64, tpu.core_type = #tpu.core_type<tc>, window_params = [{transform_indices = @transform_0, window_bounds = array<i64: 128, 256>}, {transform_indices = @transform_1, window_bounds = array<i64: 1, 256>}, {transform_indices = @transform_2, window_bounds = array<i64: 1, 128, 1>}]} {
    %c0_i32 = arith.constant 0 : i32
    %0 = arith.cmpi eq, %arg1, %c0_i32 : i32
    %1 = arith.extui %0 : i1 to i32
    %c0_i32_0 = arith.constant 0 : i32
    %2 = arith.cmpi ne, %1, %c0_i32_0 : i32
    scf.if %2 {
      %cst_10 = arith.constant 0.000000e+00 : f32
      %15 = vector.broadcast %cst_10 : f32 to vector<128x1xf32>
      %c0_11 = arith.constant 0 : index
      %c0_12 = arith.constant 0 : index
      %16 = vector.load %arg5[%c0_11, %c0_12] : memref<128x1xf32, #tpu.memory_space<vmem>>, vector<128x1xf32>
      tpu.vector_store %arg5[%c0_11, %c0_12], %15 {strides = array<i32>} : memref<128x1xf32, #tpu.memory_space<vmem>>, vector<128x1xf32>,
    } else {
    }
    %c0 = arith.constant 0 : index
    %c0_1 = arith.constant 0 : index
    %3 = vector.load %arg2[%c0, %c0_1] : memref<128x256xf32, #tpu.memory_space<vmem>>, vector<128x256xf32>
    %c0_2 = arith.constant 0 : index
    %c0_3 = arith.constant 0 : index
    %4 = vector.load %arg3[%c0_2, %c0_3] : memref<1x256xf32, #tpu.memory_space<vmem>>, vector<1x256xf32>
    %5 = vector.broadcast %4 : vector<1x256xf32> to vector<128x256xf32>
    %6 = arith.mulf %3, %5 : vector<128x256xf32>
    %c0_4 = arith.constant 0 : index
    %c0_5 = arith.constant 0 : index
    %7 = vector.load %arg5[%c0_4, %c0_5] : memref<128x1xf32, #tpu.memory_space<vmem>>, vector<128x1xf32>
    %cst = arith.constant dense<0.000000e+00> : vector<128xf32>
    %8 = vector.multi_reduction <add>, %6, %cst [1] : vector<128x256xf32> to vector<128xf32>
    %9 = vector.shape_cast %8 : vector<128xf32> to vector<128x1xf32>
    %10 = arith.addf %7, %9 : vector<128x1xf32>
    %c0_6 = arith.constant 0 : index
    %c0_7 = arith.constant 0 : index
    %11 = vector.load %arg5[%c0_6, %c0_7] : memref<128x1xf32, #tpu.memory_space<vmem>>, vector<128x1xf32>
    tpu.vector_store %arg5[%c0_6, %c0_7], %10 {strides = array<i32>} : memref<128x1xf32, #tpu.memory_space<vmem>>, vector<128x1xf32>,
    %c0_i32_8 = arith.constant 0 : i32
    %12 = arith.cmpi eq, %arg1, %c0_i32_8 : i32
    %13 = arith.extui %12 : i1 to i32
    %c0_i32_9 = arith.constant 0 : i32
    %14 = arith.cmpi ne, %13, %c0_i32_9 : i32
    scf.if %14 {
      %c0_10 = arith.constant 0 : index
      %c0_11 = arith.constant 0 : index
      %15 = vector.load %arg5[%c0_10, %c0_11] : memref<128x1xf32, #tpu.memory_space<vmem>>, vector<128x1xf32>
      %16 = vector.shape_cast %15 : vector<128x1xf32> to vector<1x128x1xf32>
      %c0_12 = arith.constant 0 : index
      %c0_13 = arith.constant 0 : index
      %c0_14 = arith.constant 0 : index
      %17 = vector.load %arg4[%c0_12, %c0_13, %c0_14] : memref<1x128x1xf32, #tpu.memory_space<vmem>>, vector<1x128x1xf32>
      tpu.vector_store %arg4[%c0_12, %c0_13, %c0_14], %16 {strides = array<i32>} : memref<1x128x1xf32, #tpu.memory_space<vmem>>, vector<1x128x1xf32>,
    } else {
    }
    return
  }
  func.func @transform_0(%arg0: i32, %arg1: i32) -> (i32, i32) {
    %c0_i32 = arith.constant 0 : i32
    return %arg0, %arg1 : i32, i32
  }
  func.func @transform_1(%arg0: i32, %arg1: i32) -> (i32, i32) {
    %c0_i32 = arith.constant 0 : i32
    %c0_i32_0 = arith.constant 0 : i32
    return %c0_i32, %arg1 : i32, i32
  }
  func.func @transform_2(%arg0: i32, %arg1: i32) -> (i32, i32, i32) {
    %c0_i32 = arith.constant 0 : i32
    %c0_i32_0 = arith.constant 0 : i32
    %c0_i32_1 = arith.constant 0 : i32
    return %arg0, %c0_i32, %c0_i32_0 : i32, i32, i32
  }
}

</mosaic_0001>

<llo_original>
// kernel: tpu_custom_call.1
$region0: #{tpu_custom_call.1}
  #allocation0 [shape = 'u32[]', space=smem, size = 0x4, offset = 0x4, fixed_abs, tag = 'smem constant byte address 0x4 - core index']
  #allocation1 [shape = 'u32[144,128]{1,0:T(1,128)}', space=vmem, size = 0x12000, scoped, tag = 'internal scratch']
  #allocation2 [shape = 'f32[128,1]{1,0:T(8,128)}', space=vmem, size = 0x10000, scoped, tag = 'scratch operand']
  %s0 = inlined_call_operand.hbm [shape: f32[128,256], index: 0, kind: input, shape index: {}]
  %s1 = inlined_call_operand.vmem [shape: f32[1,256], index: 1, kind: input, shape index: {}]
  %s2 = inlined_call_operand.vmem [shape: f32[1,128,1], index: 2, kind: output, shape index: {}]
  %s3 = sld [smem:[#allocation0]]
  $region30: #{tpu_custom_call.1} parent=0
    _
  %s5 = ssub.s32 1, %s3
  %s6 = scalar_select 0, %s5, %s3
  $region1: #{tpu_custom_call.1} parent=0
    #allocation3 [shape = 'u8[131072]{0}', space=vmem, size = 0x20000, scoped, tag = 'input window, operand 0, single buffered']
    #allocation4 [shape = 's32[1]{0}', space=sflag, size = 0x4, scoped, tag = 'scoped memory for tpu_custom_call.1']
    %7 = vsyncpa [#allocation4], 0
    // Predicated region
    $region2: #{tpu_custom_call.1} parent=1 // pred_check
      _
    $region3: #{tpu_custom_call.1} parent=1 // pred_check_branch
      %9 = sbr.rel (0) target = $region5
    $region4: #{tpu_custom_call.1} parent=1 // pred_region
      %s11 = ssub.s32 4096, 4096
      %12 = vsyncadd [#allocation4], %s11
      %s13 = sshll.u32 [#allocation3], 4
      %s14 = int_to_ptr.vmem [resolvable:$true] %s13
      %19 = dma.hbm_to_vmem [thread:$0]  %s0, 4096, %s14, [#allocation4], 256, 256, 16
    $region5: #{tpu_custom_call.1} parent=1 // pred_fallthru
      _
    // Predicated region
    $region6: #{tpu_custom_call.1} parent=1 // pred_check
      _
    $region7: #{tpu_custom_call.1} parent=1 // pred_check_branch
      %21 = sbr.rel (0) target = $region9
    $region8: #{tpu_custom_call.1} parent=1 // pred_region
      _
    $region9: #{tpu_custom_call.1} parent=1 // pred_fallthru
      _
    // Predicated region
    $region10: #{tpu_custom_call.1} parent=1 // pred_check
      _
    $region11: #{tpu_custom_call.1} parent=1 // pred_check_branch
      %23 = sbr.rel (0) target = $region13
    $region12: #{tpu_custom_call.1} parent=1 // pred_region
      %24 = dma.done [#allocation4], 4096
    $region13: #{tpu_custom_call.1} parent=1 // pred_fallthru
      _
    %p25 = scmp.eq.s32.totalorder 0, 0
    // Predicated region
    $region14: #{tpu_custom_call.1} parent=1 // pred_check
      %p26 = pneg %p25
    $region15: #{tpu_custom_call.1} parent=1 // pred_check_branch
      %28 = sbr.rel (%p26) target = $region17
    $region16: #{tpu_custom_call.1} parent=1 // pred_region
      %vm29 = vcmask 7168
      %30 = vst.msk [vmem:[#allocation2] sm:$0xff] %vm29, 0.0
      %31 = vst.msk [vmem:[#allocation2 + $0x8] sm:$0xff] %vm29, 0.0
      %32 = vst.msk [vmem:[#allocation2 + $0x10] sm:$0xff] %vm29, 0.0
      %33 = vst.msk [vmem:[#allocation2 + $0x18] sm:$0xff] %vm29, 0.0
      %34 = vst.msk [vmem:[#allocation2 + $0x20] sm:$0xff] %vm29, 0.0
      %35 = vst.msk [vmem:[#allocation2 + $0x28] sm:$0xff] %vm29, 0.0
      %36 = vst.msk [vmem:[#allocation2 + $0x30] sm:$0xff] %vm29, 0.0
      %37 = vst.msk [vmem:[#allocation2 + $0x38] sm:$0xff] %vm29, 0.0
      %38 = vst.msk [vmem:[#allocation2 + $0x40] sm:$0xff] %vm29, 0.0
      %39 = vst.msk [vmem:[#allocation2 + $0x48] sm:$0xff] %vm29, 0.0
      %40 = vst.msk [vmem:[#allocation2 + $0x50] sm:$0xff] %vm29, 0.0
      %41 = vst.msk [vmem:[#allocation2 + $0x58] sm:$0xff] %vm29, 0.0
      %42 = vst.msk [vmem:[#allocation2 + $0x60] sm:$0xff] %vm29, 0.0
      %43 = vst.msk [vmem:[#allocation2 + $0x68] sm:$0xff] %vm29, 0.0
      %44 = vst.msk [vmem:[#allocation2 + $0x70] sm:$0xff] %vm29, 0.0
      %45 = vst.msk [vmem:[#allocation2 + $0x78] sm:$0xff] %vm29, 0.0
    $region17: #{tpu_custom_call.1} parent=1 // pred_fallthru
      _
    %v46 = vld [vmem:[#allocation3] sm:$0xff]
    %v47 = vld [vmem:[#allocation3 + $0x8] sm:$0xff]
    %v48 = vld [vmem:[#allocation3 + $0x10] sm:$0xff]
    %v49 = vld [vmem:[#allocation3 + $0x18] sm:$0xff]
    %v50 = vld [vmem:[#allocation3 + $0x20] sm:$0xff]
    %v51 = vld [vmem:[#allocation3 + $0x28] sm:$0xff]
    %v52 = vld [vmem:[#allocation3 + $0x30] sm:$0xff]
    %v53 = vld [vmem:[#allocation3 + $0x38] sm:$0xff]
    %v54 = vld [vmem:[#allocation3 + $0x40] sm:$0xff]
    %v55 = vld [vmem:[#allocation3 + $0x48] sm:$0xff]
    %v56 = vld [vmem:[#allocation3 + $0x50] sm:$0xff]
    %v57 = vld [vmem:[#allocation3 + $0x58] sm:$0xff]
    %v58 = vld [vmem:[#allocation3 + $0x60] sm:$0xff]
    %v59 = vld [vmem:[#allocation3 + $0x68] sm:$0xff]
    %v60 = vld [vmem:[#allocation3 + $0x70] sm:$0xff]
    %v61 = vld [vmem:[#allocation3 + $0x78] sm:$0xff]
    %v62 = vld [vmem:[#allocation3 + $0x80] sm:$0xff]
    %v63 = vld [vmem:[#allocation3 + $0x88] sm:$0xff]
    %v64 = vld [vmem:[#allocation3 + $0x90] sm:$0xff]
    %v65 = vld [vmem:[#allocation3 + $0x98] sm:$0xff]
    %v66 = vld [vmem:[#allocation3 + $0xa0] sm:$0xff]
    %v67 = vld [vmem:[#allocation3 + $0xa8] sm:$0xff]
    %v68 = vld [vmem:[#allocation3 + $0xb0] sm:$0xff]
    %v69 = vld [vmem:[#allocation3 + $0xb8] sm:$0xff]
    %v70 = vld [vmem:[#allocation3 + $0xc0] sm:$0xff]
    %v71 = vld [vmem:[#allocation3 + $0xc8] sm:$0xff]
    %v72 = vld [vmem:[#allocation3 + $0xd0] sm:$0xff]
    %v73 = vld [vmem:[#allocation3 + $0xd8] sm:$0xff]
    %v74 = vld [vmem:[#allocation3 + $0xe0] sm:$0xff]
    %v75 = vld [vmem:[#allocation3 + $0xe8] sm:$0xff]
    %v76 = vld [vmem:[#allocation3 + $0xf0] sm:$0xff]
    %v77 = vld [vmem:[#allocation3 + $0xf8] sm:$0xff]
    %v78 = vld [vmem:[%s1] sm:$0x3]
    %v80 = vlaneseq
    %v81 = vshrl.u32 %v80, 7
    %v82 = vsub.s32 0, %v81
    %v83 = vrot.slane %v78, %v82
    %v84 = vlaneseq
    %v85 = vshrl.u32 %v84, 7
    %v86 = vsub.s32 1, %v85
    %v87 = vrot.slane %v78, %v86
    %v90 = vmul.f32 %v46, %v83
    %v91 = vmul.f32 %v47, %v87
    %v92 = vmul.f32 %v48, %v83
    %v93 = vmul.f32 %v49, %v87
    %v94 = vmul.f32 %v50, %v83
    %v95 = vmul.f32 %v51, %v87
    %v96 = vmul.f32 %v52, %v83
    %v97 = vmul.f32 %v53, %v87
    %v98 = vmul.f32 %v54, %v83
    %v99 = vmul.f32 %v55, %v87
    %v100 = vmul.f32 %v56, %v83
    %v101 = vmul.f32 %v57, %v87
    %v102 = vmul.f32 %v58, %v83
    %v103 = vmul.f32 %v59, %v87
    %v104 = vmul.f32 %v60, %v83
    %v105 = vmul.f32 %v61, %v87
    %v106 = vmul.f32 %v62, %v83
    %v107 = vmul.f32 %v63, %v87
    %v108 = vmul.f32 %v64, %v83
    %v109 = vmul.f32 %v65, %v87
    %v110 = vmul.f32 %v66, %v83
    %v111 = vmul.f32 %v67, %v87
    %v112 = vmul.f32 %v68, %v83
    %v113 = vmul.f32 %v69, %v87
    %v114 = vmul.f32 %v70, %v83
    %v115 = vmul.f32 %v71, %v87
    %v116 = vmul.f32 %v72, %v83
    %v117 = vmul.f32 %v73, %v87
    %v118 = vmul.f32 %v74, %v83
    %v119 = vmul.f32 %v75, %v87
    %v120 = vmul.f32 %v76, %v83
    %v121 = vmul.f32 %v77, %v87
    %v122 = vld [vmem:[#allocation2] sm:$0xff]
    %v123 = vld [vmem:[#allocation2 + $0x8] sm:$0xff]
    %v124 = vld [vmem:[#allocation2 + $0x10] sm:$0xff]
    %v125 = vld [vmem:[#allocation2 + $0x18] sm:$0xff]
    %v126 = vld [vmem:[#allocation2 + $0x20] sm:$0xff]
    %v127 = vld [vmem:[#allocation2 + $0x28] sm:$0xff]
    %v128 = vld [vmem:[#allocation2 + $0x30] sm:$0xff]
    %v129 = vld [vmem:[#allocation2 + $0x38] sm:$0xff]
    %v130 = vld [vmem:[#allocation2 + $0x40] sm:$0xff]
    %v131 = vld [vmem:[#allocation2 + $0x48] sm:$0xff]
    %v132 = vld [vmem:[#allocation2 + $0x50] sm:$0xff]
    %v133 = vld [vmem:[#allocation2 + $0x58] sm:$0xff]
    %v134 = vld [vmem:[#allocation2 + $0x60] sm:$0xff]
    %v135 = vld [vmem:[#allocation2 + $0x68] sm:$0xff]
    %v136 = vld [vmem:[#allocation2 + $0x70] sm:$0xff]
    %v137 = vld [vmem:[#allocation2 + $0x78] sm:$0xff]
    %v138 = vadd.f32 %v90, %v91
    %139 = vadd.xlane.f32.xlu0 %v138
    %v140 = vpop.xlane.xlu0 %139
    %v141 = vadd.f32 %v92, %v93
    %142 = vadd.xlane.f32.xlu0 %v141
    %v143 = vpop.xlane.xlu0 %142
    %v144 = vadd.f32 %v94, %v95
    %145 = vadd.xlane.f32.xlu0 %v144
    %v146 = vpop.xlane.xlu0 %145
    %v147 = vadd.f32 %v96, %v97
    %148 = vadd.xlane.f32.xlu0 %v147
    %v149 = vpop.xlane.xlu0 %148
    %v150 = vadd.f32 %v98, %v99
    %151 = vadd.xlane.f32.xlu0 %v150
    %v152 = vpop.xlane.xlu0 %151
    %v153 = vadd.f32 %v100, %v101
    %154 = vadd.xlane.f32.xlu0 %v153
    %v155 = vpop.xlane.xlu0 %154
    %v156 = vadd.f32 %v102, %v103
    %157 = vadd.xlane.f32.xlu0 %v156
    %v158 = vpop.xlane.xlu0 %157
    %v159 = vadd.f32 %v104, %v105
    %160 = vadd.xlane.f32.xlu0 %v159
    %v161 = vpop.xlane.xlu0 %160
    %v162 = vadd.f32 %v106, %v107
    %163 = vadd.xlane.f32.xlu0 %v162
    %v164 = vpop.xlane.xlu0 %163
    %v165 = vadd.f32 %v108, %v109
    %166 = vadd.xlane.f32.xlu0 %v165
    %v167 = vpop.xlane.xlu0 %166
    %v168 = vadd.f32 %v110, %v111
    %169 = vadd.xlane.f32.xlu0 %v168
    %v170 = vpop.xlane.xlu0 %169
    %v171 = vadd.f32 %v112, %v113
    %172 = vadd.xlane.f32.xlu0 %v171
    %v173 = vpop.xlane.xlu0 %172
    %v174 = vadd.f32 %v114, %v115
    %175 = vadd.xlane.f32.xlu0 %v174
    %v176 = vpop.xlane.xlu0 %175
    %v177 = vadd.f32 %v116, %v117
    %178 = vadd.xlane.f32.xlu0 %v177
    %v179 = vpop.xlane.xlu0 %178
    %v180 = vadd.f32 %v118, %v119
    %181 = vadd.xlane.f32.xlu0 %v180
    %v182 = vpop.xlane.xlu0 %181
    %v183 = vadd.f32 %v120, %v121
    %184 = vadd.xlane.f32.xlu0 %v183
    %v185 = vpop.xlane.xlu0 %184
    %v186 = vadd.f32 %v122, %v140
    %v187 = vadd.f32 %v123, %v143
    %v188 = vadd.f32 %v124, %v146
    %v189 = vadd.f32 %v125, %v149
    %v190 = vadd.f32 %v126, %v152
    %v191 = vadd.f32 %v127, %v155
    %v192 = vadd.f32 %v128, %v158
    %v193 = vadd.f32 %v129, %v161
    %v194 = vadd.f32 %v130, %v164
    %v195 = vadd.f32 %v131, %v167
    %v196 = vadd.f32 %v132, %v170
    %v197 = vadd.f32 %v133, %v173
    %v198 = vadd.f32 %v134, %v176
    %v199 = vadd.f32 %v135, %v179
    %v200 = vadd.f32 %v136, %v182
    %v201 = vadd.f32 %v137, %v185
    %vm202 = vcmask 7168
    %203 = vst.msk [vmem:[#allocation2] sm:$0xff] %vm202, %v186
    %204 = vst.msk [vmem:[#allocation2 + $0x8] sm:$0xff] %vm202, %v187
    %205 = vst.msk [vmem:[#allocation2 + $0x10] sm:$0xff] %vm202, %v188
    %206 = vst.msk [vmem:[#allocation2 + $0x18] sm:$0xff] %vm202, %v189
    %207 = vst.msk [vmem:[#allocation2 + $0x20] sm:$0xff] %vm202, %v190
    %208 = vst.msk [vmem:[#allocation2 + $0x28] sm:$0xff] %vm202, %v191
    %209 = vst.msk [vmem:[#allocation2 + $0x30] sm:$0xff] %vm202, %v192
    %210 = vst.msk [vmem:[#allocation2 + $0x38] sm:$0xff] %vm202, %v193
    %211 = vst.msk [vmem:[#allocation2 + $0x40] sm:$0xff] %vm202, %v194
    %212 = vst.msk [vmem:[#allocation2 + $0x48] sm:$0xff] %vm202, %v195
    %213 = vst.msk [vmem:[#allocation2 + $0x50] sm:$0xff] %vm202, %v196
    %214 = vst.msk [vmem:[#allocation2 + $0x58] sm:$0xff] %vm202, %v197
    %215 = vst.msk [vmem:[#allocation2 + $0x60] sm:$0xff] %vm202, %v198
    %216 = vst.msk [vmem:[#allocation2 + $0x68] sm:$0xff] %vm202, %v199
    %217 = vst.msk [vmem:[#allocation2 + $0x70] sm:$0xff] %vm202, %v200
    %218 = vst.msk [vmem:[#allocation2 + $0x78] sm:$0xff] %vm202, %v201
    // Predicated region
    $region18: #{tpu_custom_call.1} parent=1 // pred_check
      %p219 = pneg %p25
    $region19: #{tpu_custom_call.1} parent=1 // pred_check_branch
      %221 = sbr.rel (%p219) target = $region21
    $region20: #{tpu_custom_call.1} parent=1 // pred_region
      %v222 = vld [vmem:[#allocation2] sm:$0xff]
      %v223 = vld [vmem:[#allocation2 + $0x8] sm:$0xff]
      %v224 = vld [vmem:[#allocation2 + $0x10] sm:$0xff]
      %v225 = vld [vmem:[#allocation2 + $0x18] sm:$0xff]
      %v226 = vld [vmem:[#allocation2 + $0x20] sm:$0xff]
      %v227 = vld [vmem:[#allocation2 + $0x28] sm:$0xff]
      %v228 = vld [vmem:[#allocation2 + $0x30] sm:$0xff]
      %v229 = vld [vmem:[#allocation2 + $0x38] sm:$0xff]
      %v230 = vld [vmem:[#allocation2 + $0x40] sm:$0xff]
      %v231 = vld [vmem:[#allocation2 + $0x48] sm:$0xff]
      %v232 = vld [vmem:[#allocation2 + $0x50] sm:$0xff]
      %v233 = vld [vmem:[#allocation2 + $0x58] sm:$0xff]
      %v234 = vld [vmem:[#allocation2 + $0x60] sm:$0xff]
      %v235 = vld [vmem:[#allocation2 + $0x68] sm:$0xff]
      %v236 = vld [vmem:[#allocation2 + $0x70] sm:$0xff]
      %v237 = vld [vmem:[#allocation2 + $0x78] sm:$0xff]
      %238 = vst.msk [vmem:[%s2] sm:$0xff] %vm202, %v222
      %239 = vst.msk [vmem:[%s2 + $0x8] sm:$0xff] %vm202, %v223
      %240 = vst.msk [vmem:[%s2 + $0x10] sm:$0xff] %vm202, %v224
      %241 = vst.msk [vmem:[%s2 + $0x18] sm:$0xff] %vm202, %v225
      %242 = vst.msk [vmem:[%s2 + $0x20] sm:$0xff] %vm202, %v226
      %243 = vst.msk [vmem:[%s2 + $0x28] sm:$0xff] %vm202, %v227
      %244 = vst.msk [vmem:[%s2 + $0x30] sm:$0xff] %vm202, %v228
      %245 = vst.msk [vmem:[%s2 + $0x38] sm:$0xff] %vm202, %v229
      %246 = vst.msk [vmem:[%s2 + $0x40] sm:$0xff] %vm202, %v230
      %247 = vst.msk [vmem:[%s2 + $0x48] sm:$0xff] %vm202, %v231
      %248 = vst.msk [vmem:[%s2 + $0x50] sm:$0xff] %vm202, %v232
      %249 = vst.msk [vmem:[%s2 + $0x58] sm:$0xff] %vm202, %v233
      %250 = vst.msk [vmem:[%s2 + $0x60] sm:$0xff] %vm202, %v234
      %251 = vst.msk [vmem:[%s2 + $0x68] sm:$0xff] %vm202, %v235
      %252 = vst.msk [vmem:[%s2 + $0x70] sm:$0xff] %vm202, %v236
      %253 = vst.msk [vmem:[%s2 + $0x78] sm:$0xff] %vm202, %v237
    $region21: #{tpu_custom_call.1} parent=1 // pred_fallthru
      _
    // Predicated region
    $region22: #{tpu_custom_call.1} parent=1 // pred_check
      _
    $region23: #{tpu_custom_call.1} parent=1 // pred_check_branch
      %255 = sbr.rel (0) target = $region25
    $region24: #{tpu_custom_call.1} parent=1 // pred_region
      _
    $region25: #{tpu_custom_call.1} parent=1 // pred_fallthru
      _
    // Predicated region
    $region26: #{tpu_custom_call.1} parent=1 // pred_check
      _
    $region27: #{tpu_custom_call.1} parent=1 // pred_check_branch
      %257 = sbr.rel (0) target = $region29
    $region28: #{tpu_custom_call.1} parent=1 // pred_region
      _
    $region29: #{tpu_custom_call.1} parent=1 // pred_fallthru
      _
    %258 = vsyncpa [#allocation4], 1

</llo_original>
